<compile_context>
chip_gen: v6e
topology: v6e:2x2x1
jax: 0.10.0
libtpu: 0.0.40
codegen_flags: <defaults>
</compile_context>

<pallas_src>
import jax
import jax.numpy as jnp
from jax.experimental import pallas as pl
from jax.experimental.pallas import tpu as pltpu


def _round_up(x, m):
    return ((x + m - 1) // m) * m


def mlp_kernel(x_ref, w1_ref, b1_ref, w2_ref, b2_ref, o_ref):
    # ---- Layer 1 on the MXU: (TB, D) @ (D, H) -> (TB, H), f32 accumulation.
    # x is DMA'd as f32 (native HBM layout); cast to bf16 in-register so the
    # MXU gets a single-pass bf16 matmul without any extra HBM traffic.
    x = x_ref[...].astype(jnp.bfloat16)
    h = jnp.dot(x, w1_ref[...], preferred_element_type=jnp.float32)
    h = jnp.maximum(h + b1_ref[...], 0.0)          # bias + ReLU (f32, VPU)

    # ---- Layer 2: contract the hidden dim against the lane-dense (1, H) w2
    # row. NT dot_general lands the result as a lane-dense (1, TB) row instead
    # of a 1-lane-wide (TB, 1) column -> unmasked lane-dense output stores.
    # bf16 operands keep this a single-pass MXU op on v6e/v7x; accumulate f32.
    y = jax.lax.dot_general(
        w2_ref[...], h.astype(jnp.bfloat16),
        dimension_numbers=(((1,), (1,)), ((), ())),
        preferred_element_type=jnp.float32)        # (1, TB)

    # ---- scalar bias from SMEM + sigmoid epilogue, kept in f32 (v5e-safe).
    y = y + b2_ref[0, 0]
    o_ref[...] = jax.nn.sigmoid(y).reshape(o_ref.shape).astype(o_ref.dtype)


def difficulty_regressor(x, w1, b1, w2, b2, *, block_b=2048):
    """Forward pass: x (B, D) f32 -> (B, 1) f32 probabilities."""
    B, D = x.shape
    H = w1.shape[1]
    assert w1.shape == (D, H) and b1.shape == (1, H)
    assert w2.shape == (H, 1) and b2.shape == (1, 1)

    # Batch tile: lane-aligned (multiple of 128), capped at the (rounded-up)
    # batch.  No host-side padding of x: the last block may be partial.
    tb_full = _round_up(B, 128)
    tb = min(_round_up(block_b, 128), tb_full)
    # Keep at least 2 grid steps when the batch is big enough to split, so the
    # "parallel" axis can shard across both v7x TensorCores (no-op on v5e/v6e).
    if tb == tb_full and tb >= 256:
        tb = _round_up(pl.cdiv(B, 2), 128)
    g = pl.cdiv(B, tb)

    # Weights cast once (tiny: ~196 KiB); they stay VMEM-resident across steps.
    w1_c = w1.astype(jnp.bfloat16)
    w2_row = w2.reshape(1, H).astype(jnp.bfloat16)  # lane-dense layer-2 weights

    # Explicit scoped-VMEM budget: f32 x tile double-buffered dominates.
    # (Constant-index weight specs are never re-fetched, but budget their
    # second buffer anyway; the win from pl.Buffered(1) is negligible here.)
    vmem_bytes = (
        2 * tb * D * 4                          # x tile, f32, double-buffered
        + 2 * (D * H * 2 + H * 4 + H * 2)       # W1 (bf16) + b1 (f32) + w2 (bf16)
        + 2 * tb * 4                            # (1, tb) f32 output row, x2
        + tb * H * 4                            # layer-1 activation temp
    )
    vmem_limit = int(min(vmem_bytes + (8 << 20), 64 << 20))

    cost = pl.CostEstimate(
        flops=2 * B * D * H + 2 * B * H,
        transcendentals=B,                                  # sigmoid
        bytes_accessed=(B * D * 4                           # x read (f32)
                        + D * H * 2 + H * 4 + H * 2 + 4     # weights / biases
                        + g * tb * 4),                      # output writeback
    )

    out = pl.pallas_call(
        mlp_kernel,
        out_shape=jax.ShapeDtypeStruct((g, 1, tb), jnp.float32),
        grid_spec=pltpu.PrefetchScalarGridSpec(
            num_scalar_prefetch=0,
            grid=(g,),
            in_specs=[
                # x: tiled over batch, f32 DMA pipelined behind the matmul.
                pl.BlockSpec((tb, D), lambda i: (i, 0)),
                # Weights/biases: constant block index -> VMEM-resident
                # across all grid steps (no re-DMA).
                pl.BlockSpec((D, H), lambda i: (0, 0)),
                pl.BlockSpec((1, H), lambda i: (0, 0)),
                pl.BlockSpec((1, H), lambda i: (0, 0)),
                # b2 is a single scalar -> SMEM, not a padded VMEM tile.
                pl.BlockSpec(memory_space=pltpu.MemorySpace.SMEM),
            ],
            # Lane-dense (1, 1, TB) output blocks; reshaped to (B, 1) below.
            out_specs=pl.BlockSpec((1, 1, tb), lambda i: (i, 0, 0)),
        ),
        compiler_params=pltpu.CompilerParams(
            dimension_semantics=("parallel",),   # batch axis, megacore-shardable
            vmem_limit_bytes=vmem_limit,
        ),
        cost_estimate=cost,
    )(x, w1_c, b1, w2_row, b2)

    # Free layout plumbing back to the PyTorch (B, 1) contract; rows >= B came
    # from the partial last x block and are dropped here.
    return out.reshape(g * tb, 1)[:B]


def init_params(key, input_dim=768, hidden=128):
    """PyTorch nn.Linear-style init: U[-1/sqrt(fan_in), 1/sqrt(fan_in)]."""
    k1, k2, k3, k4 = jax.random.split(key, 4)
    bound1 = 1.0 / jnp.sqrt(input_dim)
    bound2 = 1.0 / jnp.sqrt(hidden)
    w1 = jax.random.uniform(k1, (input_dim, hidden), jnp.float32, -bound1, bound1)
    b1 = jax.random.uniform(k2, (1, hidden), jnp.float32, -bound1, bound1)
    w2 = jax.random.uniform(k3, (hidden, 1), jnp.float32, -bound2, bound2)
    b2 = jax.random.uniform(k4, (1, 1), jnp.float32, -bound2, bound2)
    return w1, b1, w2, b2


if __name__ == "__main__":
    key = jax.random.PRNGKey(0)
    k_x, k_p = jax.random.split(key)

    # Shapes implied by the module: input_dim=768, hidden=128; small batch.
    B, D, H = 8, 768, 128
    x = jax.random.normal(k_x, (B, D), jnp.float32)
    w1, b1, w2, b2 = init_params(k_p, input_dim=D, hidden=H)

    out = jax.jit(difficulty_regressor)(x, w1, b1, w2, b2)
    out = jax.block_until_ready(out)

    # Pure-JAX f32 reference (kernel uses bf16 matmul operands, so tolerance
    # is relaxed accordingly; sigmoid output is bounded in (0, 1)).
    ref = jax.nn.sigmoid(jnp.maximum(x @ w1 + b1, 0.0) @ w2 + b2)
    assert out.shape == (B, 1)
    assert bool(jnp.all(jnp.isfinite(out)))
    assert jnp.allclose(out, ref, atol=1e-2, rtol=1e-2), (
        f"max abs diff = {jnp.max(jnp.abs(out - ref))}")

    print("KERNEL_OK")
</pallas_src>

<mosaic_0001>
module attributes {stable_mosaic.version = 11 : i64} {
  func.func @mlp_kernel(%arg0: i32, %arg1: memref<128x768xf32, #tpu.memory_space<vmem>>, %arg2: memref<768x128xbf16, #tpu.memory_space<vmem>>, %arg3: memref<1x128xf32, #tpu.memory_space<vmem>>, %arg4: memref<1x128xbf16, #tpu.memory_space<vmem>>, %arg5: memref<1x1xf32, #tpu.memory_space<smem>>, %arg6: memref<1x1x128xf32, #tpu.memory_space<vmem>>) attributes {dimension_semantics = [#tpu.dimension_semantics<parallel>], iteration_bounds = array<i64: 1>, scalar_prefetch = 0 : i64, scratch_operands = 0 : i64, tpu.core_type = #tpu.core_type<tc>, window_params = [{transform_indices = @transform_0, window_bounds = array<i64: 128, 768>}, {pipeline_mode = #tpu.pipeline_mode<synchronous>, transform_indices = @transform_1, window_bounds = array<i64: 768, 128>}, {pipeline_mode = #tpu.pipeline_mode<synchronous>, transform_indices = @transform_2, window_bounds = array<i64: 1, 128>}, {pipeline_mode = #tpu.pipeline_mode<synchronous>, transform_indices = @transform_3, window_bounds = array<i64: 1, 128>}, {transform_indices = @transform_4, window_bounds = array<i64: 1, 1>}, {transform_indices = @transform_5, window_bounds = array<i64: 1, 1, 128>}]} {
    %c0 = arith.constant 0 : index
    %c0_0 = arith.constant 0 : index
    %0 = vector.load %arg1[%c0, %c0_0] : memref<128x768xf32, #tpu.memory_space<vmem>>, vector<128x768xf32>
    %1 = arith.truncf %0 : vector<128x768xf32> to vector<128x768xbf16>
    %c0_1 = arith.constant 0 : index
    %c0_2 = arith.constant 0 : index
    %2 = vector.load %arg2[%c0_1, %c0_2] : memref<768x128xbf16, #tpu.memory_space<vmem>>, vector<768x128xbf16>
    %cst = arith.constant dense<0.000000e+00> : vector<128x128xf32>
    %3 = tpu.matmul %1, %2, %cst {dimension_numbers = #tpu.dot_dimension_numbers<[1], [0], [0], [1], [0, 0, 1, 1], [], []>} : vector<128x768xbf16>, vector<768x128xbf16>, vector<128x128xf32> -> vector<128x128xf32>
    %c0_3 = arith.constant 0 : index
    %c0_4 = arith.constant 0 : index
    %4 = vector.load %arg3[%c0_3, %c0_4] : memref<1x128xf32, #tpu.memory_space<vmem>>, vector<1x128xf32>
    %5 = vector.broadcast %4 : vector<1x128xf32> to vector<128x128xf32>
    %6 = arith.addf %3, %5 : vector<128x128xf32>
    %cst_5 = arith.constant 0.000000e+00 : f32
    %7 = vector.broadcast %cst_5 : f32 to vector<128x128xf32>
    %8 = arith.maximumf %6, %7 : vector<128x128xf32>
    %c0_6 = arith.constant 0 : index
    %c0_7 = arith.constant 0 : index
    %9 = vector.load %arg4[%c0_6, %c0_7] : memref<1x128xbf16, #tpu.memory_space<vmem>>, vector<1x128xbf16>
    %10 = arith.truncf %8 : vector<128x128xf32> to vector<128x128xbf16>
    %cst_8 = arith.constant dense<0.000000e+00> : vector<1x128xf32>
    %11 = tpu.matmul %9, %10, %cst_8 {dimension_numbers = #tpu.dot_dimension_numbers<[1], [1], [0], [0], [0, 0, 1, 0], [], []>} : vector<1x128xbf16>, vector<128x128xbf16>, vector<1x128xf32> -> vector<1x128xf32>
    %c0_9 = arith.constant 0 : index
    %c0_10 = arith.constant 0 : index
    %12 = memref.load %arg5[%c0_9, %c0_10] : memref<1x1xf32, #tpu.memory_space<smem>>
    %13 = vector.broadcast %12 : f32 to vector<1x128xf32>
    %14 = arith.addf %11, %13 : vector<1x128xf32>
    %15 = arith.negf %14 : vector<1x128xf32>
    %16 = math.exp %15 : vector<1x128xf32>
    %cst_11 = arith.constant 1.000000e+00 : f32
    %17 = vector.broadcast %cst_11 : f32 to vector<1x128xf32>
    %18 = arith.addf %17, %16 : vector<1x128xf32>
    %19 = arith.divf %17, %18 : vector<1x128xf32>
    %20 = vector.shape_cast %19 : vector<1x128xf32> to vector<1x1x128xf32>
    %c0_12 = arith.constant 0 : index
    %c0_13 = arith.constant 0 : index
    %c0_14 = arith.constant 0 : index
    %21 = vector.load %arg6[%c0_12, %c0_13, %c0_14] : memref<1x1x128xf32, #tpu.memory_space<vmem>>, vector<1x1x128xf32>
    tpu.vector_store %arg6[%c0_12, %c0_13, %c0_14], %20 {strides = array<i32>} : memref<1x1x128xf32, #tpu.memory_space<vmem>>, vector<1x1x128xf32>,
    return
  }
  func.func @transform_0(%arg0: i32) -> (i32, i32) {
    %c0_i32 = arith.constant 0 : i32
    %c0_i32_0 = arith.constant 0 : i32
    return %arg0, %c0_i32 : i32, i32
  }
  func.func @transform_1(%arg0: i32) -> (i32, i32) {
    %c0_i32 = arith.constant 0 : i32
    %c0_i32_0 = arith.constant 0 : i32
    %c0_i32_1 = arith.constant 0 : i32
    return %c0_i32, %c0_i32_0 : i32, i32
  }
  func.func @transform_2(%arg0: i32) -> (i32, i32) {
    %c0_i32 = arith.constant 0 : i32
    %c0_i32_0 = arith.constant 0 : i32
    %c0_i32_1 = arith.constant 0 : i32
    return %c0_i32, %c0_i32_0 : i32, i32
  }
  func.func @transform_3(%arg0: i32) -> (i32, i32) {
    %c0_i32 = arith.constant 0 : i32
    %c0_i32_0 = arith.constant 0 : i32
    %c0_i32_1 = arith.constant 0 : i32
    return %c0_i32, %c0_i32_0 : i32, i32
  }
  func.func @transform_4(%arg0: i32) -> (i32, i32) {
    %c0_i32 = arith.constant 0 : i32
    %c0_i32_0 = arith.constant 0 : i32
    %c0_i32_1 = arith.constant 0 : i32
    return %c0_i32, %c0_i32_0 : i32, i32
  }
  func.func @transform_5(%arg0: i32) -> (i32, i32, i32) {
    %c0_i32 = arith.constant 0 : i32
    %c0_i32_0 = arith.constant 0 : i32
    %c0_i32_1 = arith.constant 0 : i32
    return %arg0, %c0_i32, %c0_i32_0 : i32, i32, i32
  }
}

</mosaic_0001>

<llo_original>
// kernel: difficulty_regressor.1
$region0: #{difficulty_regressor.1}
  #allocation0 [shape = 'u32[]', space=smem, size = 0x4, offset = 0x4, fixed_abs, tag = 'smem constant byte address 0x4 - core index']
  #allocation1 [shape = 'u32[144,128]{1,0:T(1,128)}', space=vmem, size = 0x12000, scoped, tag = 'internal scratch']
  #allocation2 [shape = 'f32[1,1]{1,0:T(1,128)S(6)}', space=smem, size = 0x200, scoped, tag = 'scoped memory for difficulty_regressor.1']
  %s0 = inlined_call_operand.vmem [shape: f32[8,768], index: 0, kind: input, shape index: {}]
  %s1 = inlined_call_operand.vmem [shape: bf16[768,128], index: 1, kind: input, shape index: {}]
  %s2 = inlined_call_operand.vmem [shape: f32[1,128], index: 2, kind: input, shape index: {}]
  %s3 = inlined_call_operand.vmem [shape: bf16[1,128], index: 3, kind: input, shape index: {}]
  %s4 = inlined_call_operand.<no memory space> [shape: f32[1,1], index: 4, kind: input, shape index: {}]
  %s5 = inlined_call_operand.vmem [shape: f32[1,1,128], index: 5, kind: output, shape index: {}]
  %s6 = sld [smem:[#allocation0]]
  $region30: #{difficulty_regressor.1} parent=0
    _
  %s8 = ssub.s32 1, %s6
  %s9 = scalar_select 0, %s8, %s6
  %10 = sst [smem:[#allocation2]] %s4
  // Predicated region
  $region2: #{difficulty_regressor.1} parent=0 // pred_check
    _
  $region3: #{difficulty_regressor.1} parent=0 // pred_check_branch
    %12 = sbr.rel (0) target = $region5
  $region4: #{difficulty_regressor.1} parent=0 // pred_region
    _
  $region5: #{difficulty_regressor.1} parent=0 // pred_fallthru
    _
  // Predicated region
  $region6: #{difficulty_regressor.1} parent=0 // pred_check
    _
  $region7: #{difficulty_regressor.1} parent=0 // pred_check_branch
    %14 = sbr.rel (0) target = $region9
  $region8: #{difficulty_regressor.1} parent=0 // pred_region
    _
  $region9: #{difficulty_regressor.1} parent=0 // pred_fallthru
    _
  // Predicated region
  $region10: #{difficulty_regressor.1} parent=0 // pred_check
    _
  $region11: #{difficulty_regressor.1} parent=0 // pred_check_branch
    %16 = sbr.rel (0) target = $region13
  $region12: #{difficulty_regressor.1} parent=0 // pred_region
    _
  $region13: #{difficulty_regressor.1} parent=0 // pred_fallthru
    _
  // Predicated region
  $region14: #{difficulty_regressor.1} parent=0 // pred_check
    _
  $region15: #{difficulty_regressor.1} parent=0 // pred_check_branch
    %18 = sbr.rel (0) target = $region17
  $region16: #{difficulty_regressor.1} parent=0 // pred_region
    _
  $region17: #{difficulty_regressor.1} parent=0 // pred_fallthru
    _
  // Predicated region
  $region18: #{difficulty_regressor.1} parent=0 // pred_check
    _
  $region19: #{difficulty_regressor.1} parent=0 // pred_check_branch
    %20 = sbr.rel (0) target = $region21
  $region20: #{difficulty_regressor.1} parent=0 // pred_region
    _
  $region21: #{difficulty_regressor.1} parent=0 // pred_fallthru
    _
  %v22 = vld [vmem:[%s0] sm:$0xff]
  %v23 = vld [vmem:[%s0 + $0x8] sm:$0xff]
  %v24 = vld [vmem:[%s0 + $0x10] sm:$0xff]
  %v25 = vld [vmem:[%s0 + $0x18] sm:$0xff]
  %v26 = vld [vmem:[%s0 + $0x20] sm:$0xff]
  %v27 = vld [vmem:[%s0 + $0x28] sm:$0xff]
  %v28 = vld [vmem:[%s0 + $0x30] sm:$0xff]
  %v29 = vld [vmem:[%s0 + $0x38] sm:$0xff]
  %v30 = vld [vmem:[%s0 + $0x40] sm:$0xff]
  %v31 = vld [vmem:[%s0 + $0x48] sm:$0xff]
  %v32 = vld [vmem:[%s0 + $0x50] sm:$0xff]
  %v33 = vld [vmem:[%s0 + $0x58] sm:$0xff]
  %v34 = vld [vmem:[%s0 + $0x60] sm:$0xff]
  %v35 = vld [vmem:[%s0 + $0x68] sm:$0xff]
  %v36 = vld [vmem:[%s0 + $0x70] sm:$0xff]
  %v37 = vld [vmem:[%s0 + $0x78] sm:$0xff]
  %v38 = vld [vmem:[%s0 + $0x80] sm:$0xff]
  %v39 = vld [vmem:[%s0 + $0x88] sm:$0xff]
  %v40 = vld [vmem:[%s0 + $0x90] sm:$0xff]
  %v41 = vld [vmem:[%s0 + $0x98] sm:$0xff]
  %v42 = vld [vmem:[%s0 + $0xa0] sm:$0xff]
  %v43 = vld [vmem:[%s0 + $0xa8] sm:$0xff]
  %v44 = vld [vmem:[%s0 + $0xb0] sm:$0xff]
  %v45 = vld [vmem:[%s0 + $0xb8] sm:$0xff]
  %v46 = vld [vmem:[%s0 + $0xc0] sm:$0xff]
  %v47 = vld [vmem:[%s0 + $0xc8] sm:$0xff]
  %v48 = vld [vmem:[%s0 + $0xd0] sm:$0xff]
  %v49 = vld [vmem:[%s0 + $0xd8] sm:$0xff]
  %v50 = vld [vmem:[%s0 + $0xe0] sm:$0xff]
  %v51 = vld [vmem:[%s0 + $0xe8] sm:$0xff]
  %v52 = vld [vmem:[%s0 + $0xf0] sm:$0xff]
  %v53 = vld [vmem:[%s0 + $0xf8] sm:$0xff]
  %v54 = vld [vmem:[%s0 + $0x100] sm:$0xff]
  %v55 = vld [vmem:[%s0 + $0x108] sm:$0xff]
  %v56 = vld [vmem:[%s0 + $0x110] sm:$0xff]
  %v57 = vld [vmem:[%s0 + $0x118] sm:$0xff]
  %v58 = vld [vmem:[%s0 + $0x120] sm:$0xff]
  %v59 = vld [vmem:[%s0 + $0x128] sm:$0xff]
  %v60 = vld [vmem:[%s0 + $0x130] sm:$0xff]
  %v61 = vld [vmem:[%s0 + $0x138] sm:$0xff]
  %v62 = vld [vmem:[%s0 + $0x140] sm:$0xff]
  %v63 = vld [vmem:[%s0 + $0x148] sm:$0xff]
  %v64 = vld [vmem:[%s0 + $0x150] sm:$0xff]
  %v65 = vld [vmem:[%s0 + $0x158] sm:$0xff]
  %v66 = vld [vmem:[%s0 + $0x160] sm:$0xff]
  %v67 = vld [vmem:[%s0 + $0x168] sm:$0xff]
  %v68 = vld [vmem:[%s0 + $0x170] sm:$0xff]
  %v69 = vld [vmem:[%s0 + $0x178] sm:$0xff]
  %v70 = vld [vmem:[%s0 + $0x180] sm:$0xff]
  %v71 = vld [vmem:[%s0 + $0x188] sm:$0xff]
  %v72 = vld [vmem:[%s0 + $0x190] sm:$0xff]
  %v73 = vld [vmem:[%s0 + $0x198] sm:$0xff]
  %v74 = vld [vmem:[%s0 + $0x1a0] sm:$0xff]
  %v75 = vld [vmem:[%s0 + $0x1a8] sm:$0xff]
  %v76 = vld [vmem:[%s0 + $0x1b0] sm:$0xff]
  %v77 = vld [vmem:[%s0 + $0x1b8] sm:$0xff]
  %v78 = vld [vmem:[%s0 + $0x1c0] sm:$0xff]
  %v79 = vld [vmem:[%s0 + $0x1c8] sm:$0xff]
  %v80 = vld [vmem:[%s0 + $0x1d0] sm:$0xff]
  %v81 = vld [vmem:[%s0 + $0x1d8] sm:$0xff]
  %v82 = vld [vmem:[%s0 + $0x1e0] sm:$0xff]
  %v83 = vld [vmem:[%s0 + $0x1e8] sm:$0xff]
  %v84 = vld [vmem:[%s0 + $0x1f0] sm:$0xff]
  %v85 = vld [vmem:[%s0 + $0x1f8] sm:$0xff]
  %v86 = vld [vmem:[%s0 + $0x200] sm:$0xff]
  %v87 = vld [vmem:[%s0 + $0x208] sm:$0xff]
  %v88 = vld [vmem:[%s0 + $0x210] sm:$0xff]
  %v89 = vld [vmem:[%s0 + $0x218] sm:$0xff]
  %v90 = vld [vmem:[%s0 + $0x220] sm:$0xff]
  %v91 = vld [vmem:[%s0 + $0x228] sm:$0xff]
  %v92 = vld [vmem:[%s0 + $0x230] sm:$0xff]
  %v93 = vld [vmem:[%s0 + $0x238] sm:$0xff]
  %v94 = vld [vmem:[%s0 + $0x240] sm:$0xff]
  %v95 = vld [vmem:[%s0 + $0x248] sm:$0xff]
  %v96 = vld [vmem:[%s0 + $0x250] sm:$0xff]
  %v97 = vld [vmem:[%s0 + $0x258] sm:$0xff]
  %v98 = vld [vmem:[%s0 + $0x260] sm:$0xff]
  %v99 = vld [vmem:[%s0 + $0x268] sm:$0xff]
  %v100 = vld [vmem:[%s0 + $0x270] sm:$0xff]
  %v101 = vld [vmem:[%s0 + $0x278] sm:$0xff]
  %v102 = vld [vmem:[%s0 + $0x280] sm:$0xff]
  %v103 = vld [vmem:[%s0 + $0x288] sm:$0xff]
  %v104 = vld [vmem:[%s0 + $0x290] sm:$0xff]
  %v105 = vld [vmem:[%s0 + $0x298] sm:$0xff]
  %v106 = vld [vmem:[%s0 + $0x2a0] sm:$0xff]
  %v107 = vld [vmem:[%s0 + $0x2a8] sm:$0xff]
  %v108 = vld [vmem:[%s0 + $0x2b0] sm:$0xff]
  %v109 = vld [vmem:[%s0 + $0x2b8] sm:$0xff]
  %v110 = vld [vmem:[%s0 + $0x2c0] sm:$0xff]
  %v111 = vld [vmem:[%s0 + $0x2c8] sm:$0xff]
  %v112 = vld [vmem:[%s0 + $0x2d0] sm:$0xff]
  %v113 = vld [vmem:[%s0 + $0x2d8] sm:$0xff]
  %v114 = vld [vmem:[%s0 + $0x2e0] sm:$0xff]
  %v115 = vld [vmem:[%s0 + $0x2e8] sm:$0xff]
  %v116 = vld [vmem:[%s0 + $0x2f0] sm:$0xff]
  %v117 = vld [vmem:[%s0 + $0x2f8] sm:$0xff]
  %v118 = vpack.c.bf16 %v28, %v22
  %v119 = vpack.c.bf16 %v29, %v23
  %v120 = vpack.c.bf16 %v30, %v24
  %v121 = vpack.c.bf16 %v31, %v25
  %v122 = vpack.c.bf16 %v32, %v26
  %v123 = vpack.c.bf16 %v33, %v27
  %v124 = vpack.c.bf16 %v40, %v34
  %v125 = vpack.c.bf16 %v41, %v35
  %v126 = vpack.c.bf16 %v42, %v36
  %v127 = vpack.c.bf16 %v43, %v37
  %v128 = vpack.c.bf16 %v44, %v38
  %v129 = vpack.c.bf16 %v45, %v39
  %v130 = vpack.c.bf16 %v52, %v46
  %v131 = vpack.c.bf16 %v53, %v47
  %v132 = vpack.c.bf16 %v54, %v48
  %v133 = vpack.c.bf16 %v55, %v49
  %v134 = vpack.c.bf16 %v56, %v50
  %v135 = vpack.c.bf16 %v57, %v51
  %v136 = vpack.c.bf16 %v64, %v58
  %v137 = vpack.c.bf16 %v65, %v59
  %v138 = vpack.c.bf16 %v66, %v60
  %v139 = vpack.c.bf16 %v67, %v61
  %v140 = vpack.c.bf16 %v68, %v62
  %v141 = vpack.c.bf16 %v69, %v63
  %v142 = vpack.c.bf16 %v76, %v70
  %v143 = vpack.c.bf16 %v77, %v71
  %v144 = vpack.c.bf16 %v78, %v72
  %v145 = vpack.c.bf16 %v79, %v73
  %v146 = vpack.c.bf16 %v80, %v74
  %v147 = vpack.c.bf16 %v81, %v75
  %v148 = vpack.c.bf16 %v88, %v82
  %v149 = vpack.c.bf16 %v89, %v83
  %v150 = vpack.c.bf16 %v90, %v84
  %v151 = vpack.c.bf16 %v91, %v85
  %v152 = vpack.c.bf16 %v92, %v86
  %v153 = vpack.c.bf16 %v93, %v87
  %v154 = vpack.c.bf16 %v100, %v94
  %v155 = vpack.c.bf16 %v101, %v95
  %v156 = vpack.c.bf16 %v102, %v96
  %v157 = vpack.c.bf16 %v103, %v97
  %v158 = vpack.c.bf16 %v104, %v98
  %v159 = vpack.c.bf16 %v105, %v99
  %v160 = vpack.c.bf16 %v112, %v106
  %v161 = vpack.c.bf16 %v113, %v107
  %v162 = vpack.c.bf16 %v114, %v108
  %v163 = vpack.c.bf16 %v115, %v109
  %v164 = vpack.c.bf16 %v116, %v110
  %v165 = vpack.c.bf16 %v117, %v111
  %v166 = vld [vmem:[%s1] sm:$0xf]
  %v167 = vld [vmem:[%s1 + $0x4] sm:$0xf]
  %v168 = vld [vmem:[%s1 + $0x8] sm:$0xf]
  %v169 = vld [vmem:[%s1 + $0xc] sm:$0xf]
  %v170 = vld [vmem:[%s1 + $0x10] sm:$0xf]
  %v171 = vld [vmem:[%s1 + $0x14] sm:$0xf]
  %v172 = vld [vmem:[%s1 + $0x18] sm:$0xf]
  %v173 = vld [vmem:[%s1 + $0x1c] sm:$0xf]
  %v174 = vld [vmem:[%s1 + $0x20] sm:$0xf]
  %v175 = vld [vmem:[%s1 + $0x24] sm:$0xf]
  %v176 = vld [vmem:[%s1 + $0x28] sm:$0xf]
  %v177 = vld [vmem:[%s1 + $0x2c] sm:$0xf]
  %v178 = vld [vmem:[%s1 + $0x30] sm:$0xf]
  %v179 = vld [vmem:[%s1 + $0x34] sm:$0xf]
  %v180 = vld [vmem:[%s1 + $0x38] sm:$0xf]
  %v181 = vld [vmem:[%s1 + $0x3c] sm:$0xf]
  %v182 = vld [vmem:[%s1 + $0x40] sm:$0xf]
  %v183 = vld [vmem:[%s1 + $0x44] sm:$0xf]
  %v184 = vld [vmem:[%s1 + $0x48] sm:$0xf]
  %v185 = vld [vmem:[%s1 + $0x4c] sm:$0xf]
  %v186 = vld [vmem:[%s1 + $0x50] sm:$0xf]
  %v187 = vld [vmem:[%s1 + $0x54] sm:$0xf]
  %v188 = vld [vmem:[%s1 + $0x58] sm:$0xf]
  %v189 = vld [vmem:[%s1 + $0x5c] sm:$0xf]
  %v190 = vld [vmem:[%s1 + $0x60] sm:$0xf]
  %v191 = vld [vmem:[%s1 + $0x64] sm:$0xf]
  %v192 = vld [vmem:[%s1 + $0x68] sm:$0xf]
  %v193 = vld [vmem:[%s1 + $0x6c] sm:$0xf]
  %v194 = vld [vmem:[%s1 + $0x70] sm:$0xf]
  %v195 = vld [vmem:[%s1 + $0x74] sm:$0xf]
  %v196 = vld [vmem:[%s1 + $0x78] sm:$0xf]
  %v197 = vld [vmem:[%s1 + $0x7c] sm:$0xf]
  %v198 = vld [vmem:[%s1 + $0x80] sm:$0xf]
  %v199 = vld [vmem:[%s1 + $0x84] sm:$0xf]
  %v200 = vld [vmem:[%s1 + $0x88] sm:$0xf]
  %v201 = vld [vmem:[%s1 + $0x8c] sm:$0xf]
  %v202 = vld [vmem:[%s1 + $0x90] sm:$0xf]
  %v203 = vld [vmem:[%s1 + $0x94] sm:$0xf]
  %v204 = vld [vmem:[%s1 + $0x98] sm:$0xf]
  %v205 = vld [vmem:[%s1 + $0x9c] sm:$0xf]
  %v206 = vld [vmem:[%s1 + $0xa0] sm:$0xf]
  %v207 = vld [vmem:[%s1 + $0xa4] sm:$0xf]
  %v208 = vld [vmem:[%s1 + $0xa8] sm:$0xf]
  %v209 = vld [vmem:[%s1 + $0xac] sm:$0xf]
  %v210 = vld [vmem:[%s1 + $0xb0] sm:$0xf]
  %v211 = vld [vmem:[%s1 + $0xb4] sm:$0xf]
  %v212 = vld [vmem:[%s1 + $0xb8] sm:$0xf]
  %v213 = vld [vmem:[%s1 + $0xbc] sm:$0xf]
  %v214 = vld [vmem:[%s1 + $0xc0] sm:$0xf]
  %v215 = vld [vmem:[%s1 + $0xc4] sm:$0xf]
  %v216 = vld [vmem:[%s1 + $0xc8] sm:$0xf]
  %v217 = vld [vmem:[%s1 + $0xcc] sm:$0xf]
  %v218 = vld [vmem:[%s1 + $0xd0] sm:$0xf]
  %v219 = vld [vmem:[%s1 + $0xd4] sm:$0xf]
  %v220 = vld [vmem:[%s1 + $0xd8] sm:$0xf]
  %v221 = vld [vmem:[%s1 + $0xdc] sm:$0xf]
  %v222 = vld [vmem:[%s1 + $0xe0] sm:$0xf]
  %v223 = vld [vmem:[%s1 + $0xe4] sm:$0xf]
  %v224 = vld [vmem:[%s1 + $0xe8] sm:$0xf]
  %v225 = vld [vmem:[%s1 + $0xec] sm:$0xf]
  %v226 = vld [vmem:[%s1 + $0xf0] sm:$0xf]
  %v227 = vld [vmem:[%s1 + $0xf4] sm:$0xf]
  %v228 = vld [vmem:[%s1 + $0xf8] sm:$0xf]
  %v229 = vld [vmem:[%s1 + $0xfc] sm:$0xf]
  %v230 = vld [vmem:[%s1 + $0x100] sm:$0xf]
  %v231 = vld [vmem:[%s1 + $0x104] sm:$0xf]
  %v232 = vld [vmem:[%s1 + $0x108] sm:$0xf]
  %v233 = vld [vmem:[%s1 + $0x10c] sm:$0xf]
  %v234 = vld [vmem:[%s1 + $0x110] sm:$0xf]
  %v235 = vld [vmem:[%s1 + $0x114] sm:$0xf]
  %v236 = vld [vmem:[%s1 + $0x118] sm:$0xf]
  %v237 = vld [vmem:[%s1 + $0x11c] sm:$0xf]
  %v238 = vld [vmem:[%s1 + $0x120] sm:$0xf]
  %v239 = vld [vmem:[%s1 + $0x124] sm:$0xf]
  %v240 = vld [vmem:[%s1 + $0x128] sm:$0xf]
  %v241 = vld [vmem:[%s1 + $0x12c] sm:$0xf]
  %v242 = vld [vmem:[%s1 + $0x130] sm:$0xf]
  %v243 = vld [vmem:[%s1 + $0x134] sm:$0xf]
  %v244 = vld [vmem:[%s1 + $0x138] sm:$0xf]
  %v245 = vld [vmem:[%s1 + $0x13c] sm:$0xf]
  %v246 = vld [vmem:[%s1 + $0x140] sm:$0xf]
  %v247 = vld [vmem:[%s1 + $0x144] sm:$0xf]
  %v248 = vld [vmem:[%s1 + $0x148] sm:$0xf]
  %v249 = vld [vmem:[%s1 + $0x14c] sm:$0xf]
  %v250 = vld [vmem:[%s1 + $0x150] sm:$0xf]
  %v251 = vld [vmem:[%s1 + $0x154] sm:$0xf]
  %v252 = vld [vmem:[%s1 + $0x158] sm:$0xf]
  %v253 = vld [vmem:[%s1 + $0x15c] sm:$0xf]
  %v254 = vld [vmem:[%s1 + $0x160] sm:$0xf]
  %v255 = vld [vmem:[%s1 + $0x164] sm:$0xf]
  %v256 = vld [vmem:[%s1 + $0x168] sm:$0xf]
  %v257 = vld [vmem:[%s1 + $0x16c] sm:$0xf]
  %v258 = vld [vmem:[%s1 + $0x170] sm:$0xf]
  %v259 = vld [vmem:[%s1 + $0x174] sm:$0xf]
  %v260 = vld [vmem:[%s1 + $0x178] sm:$0xf]
  %v261 = vld [vmem:[%s1 + $0x17c] sm:$0xf]
  %v262 = vld [vmem:[%s2] sm:$0x1]
  %v264 = vlaneseq
  %v265 = vshrl.u32 %v264, 7
  %v266 = vsub.s32 0, %v265
  %v267 = vrot.slane %v262, %v266
  %v365 = vunpack.c.l.b16 %v166
  %v366 = vunpack.c.l.b16 %v167
  %v367 = vunpack.c.l.b16 %v168
  %v368 = vunpack.c.l.b16 %v169
  %v369 = vunpack.c.l.b16 %v170
  %v370 = vunpack.c.l.b16 %v171
  %v371 = vunpack.c.l.b16 %v172
  %v372 = vunpack.c.l.b16 %v173
  %v373 = vunpack.c.l.b16 %v174
  %v374 = vunpack.c.l.b16 %v175
  %v375 = vunpack.c.l.b16 %v176
  %v376 = vunpack.c.l.b16 %v177
  %v377 = vunpack.c.l.b16 %v178
  %v378 = vunpack.c.l.b16 %v179
  %v379 = vunpack.c.l.b16 %v180
  %v380 = vunpack.c.l.b16 %v181
  %v381 = vunpack.c.l.b16 %v182
  %v382 = vunpack.c.l.b16 %v183
  %v383 = vunpack.c.l.b16 %v184
  %v384 = vunpack.c.l.b16 %v185
  %v385 = vunpack.c.l.b16 %v186
  %v386 = vunpack.c.l.b16 %v187
  %v387 = vunpack.c.l.b16 %v188
  %v388 = vunpack.c.l.b16 %v189
  %v389 = vunpack.c.l.b16 %v190
  %v390 = vunpack.c.l.b16 %v191
  %v391 = vunpack.c.l.b16 %v192
  %v392 = vunpack.c.l.b16 %v193
  %v393 = vunpack.c.l.b16 %v194
  %v394 = vunpack.c.l.b16 %v195
  %v395 = vunpack.c.l.b16 %v196
  %v396 = vunpack.c.l.b16 %v197
  %v397 = vunpack.c.l.b16 %v198
  %v398 = vunpack.c.l.b16 %v199
  %v399 = vunpack.c.l.b16 %v200
  %v400 = vunpack.c.l.b16 %v201
  %v401 = vunpack.c.l.b16 %v202
  %v402 = vunpack.c.l.b16 %v203
  %v403 = vunpack.c.l.b16 %v204
  %v404 = vunpack.c.l.b16 %v205
  %v405 = vunpack.c.l.b16 %v206
  %v406 = vunpack.c.l.b16 %v207
  %v407 = vunpack.c.l.b16 %v208
  %v408 = vunpack.c.l.b16 %v209
  %v409 = vunpack.c.l.b16 %v210
  %v410 = vunpack.c.l.b16 %v211
  %v411 = vunpack.c.l.b16 %v212
  %v412 = vunpack.c.l.b16 %v213
  %v413 = vunpack.c.l.b16 %v214
  %v414 = vunpack.c.l.b16 %v215
  %v415 = vunpack.c.l.b16 %v216
  %v416 = vunpack.c.l.b16 %v217
  %v417 = vunpack.c.l.b16 %v218
  %v418 = vunpack.c.l.b16 %v219
  %v419 = vunpack.c.l.b16 %v220
  %v420 = vunpack.c.l.b16 %v221
  %v421 = vunpack.c.l.b16 %v222
  %v422 = vunpack.c.l.b16 %v223
  %v423 = vunpack.c.l.b16 %v224
  %v424 = vunpack.c.l.b16 %v225
  %v425 = vunpack.c.l.b16 %v226
  %v426 = vunpack.c.l.b16 %v227
  %v427 = vunpack.c.l.b16 %v228
  %v428 = vunpack.c.l.b16 %v229
  %v429 = vunpack.c.l.b16 %v230
  %v430 = vunpack.c.l.b16 %v231
  %v431 = vunpack.c.l.b16 %v232
  %v432 = vunpack.c.l.b16 %v233
  %v433 = vunpack.c.l.b16 %v234
  %v434 = vunpack.c.l.b16 %v235
  %v435 = vunpack.c.l.b16 %v236
  %v436 = vunpack.c.l.b16 %v237
  %v437 = vunpack.c.l.b16 %v238
  %v438 = vunpack.c.l.b16 %v239
  %v439 = vunpack.c.l.b16 %v240
  %v440 = vunpack.c.l.b16 %v241
  %v441 = vunpack.c.l.b16 %v242
  %v442 = vunpack.c.l.b16 %v243
  %v443 = vunpack.c.l.b16 %v244
  %v444 = vunpack.c.l.b16 %v245
  %v445 = vunpack.c.l.b16 %v246
  %v446 = vunpack.c.l.b16 %v247
  %v447 = vunpack.c.l.b16 %v248
  %v448 = vunpack.c.l.b16 %v249
  %v449 = vunpack.c.l.b16 %v250
  %v450 = vunpack.c.l.b16 %v251
  %v451 = vunpack.c.l.b16 %v252
  %v452 = vunpack.c.l.b16 %v253
  %v453 = vunpack.c.l.b16 %v254
  %v454 = vunpack.c.l.b16 %v255
  %v455 = vunpack.c.l.b16 %v256
  %v456 = vunpack.c.l.b16 %v257
  %v457 = vunpack.c.l.b16 %v258
  %v458 = vunpack.c.l.b16 %v259
  %v459 = vunpack.c.l.b16 %v260
  %v460 = vunpack.c.l.b16 %v261
  %v461 = vpack.c.b16 %v366, %v365
  %v462 = vpack.c.b16 %v368, %v367
  %v463 = vpack.c.b16 %v370, %v369
  %v464 = vpack.c.b16 %v372, %v371
  %v465 = vpack.c.b16 %v374, %v373
  %v466 = vpack.c.b16 %v376, %v375
  %v467 = vpack.c.b16 %v378, %v377
  %v468 = vpack.c.b16 %v380, %v379
  %v469 = vpack.c.b16 %v382, %v381
  %v470 = vpack.c.b16 %v384, %v383
  %v471 = vpack.c.b16 %v386, %v385
  %v472 = vpack.c.b16 %v388, %v387
  %v473 = vpack.c.b16 %v390, %v389
  %v474 = vpack.c.b16 %v392, %v391
  %v475 = vpack.c.b16 %v394, %v393
  %v476 = vpack.c.b16 %v396, %v395
  %v477 = vpack.c.b16 %v398, %v397
  %v478 = vpack.c.b16 %v400, %v399
  %v479 = vpack.c.b16 %v402, %v401
  %v480 = vpack.c.b16 %v404, %v403
  %v481 = vpack.c.b16 %v406, %v405
  %v482 = vpack.c.b16 %v408, %v407
  %v483 = vpack.c.b16 %v410, %v409
  %v484 = vpack.c.b16 %v412, %v411
  %v485 = vpack.c.b16 %v414, %v413
  %v486 = vpack.c.b16 %v416, %v415
  %v487 = vpack.c.b16 %v418, %v417
  %v488 = vpack.c.b16 %v420, %v419
  %v489 = vpack.c.b16 %v422, %v421
  %v490 = vpack.c.b16 %v424, %v423
  %v491 = vpack.c.b16 %v426, %v425
  %v492 = vpack.c.b16 %v428, %v427
  %v493 = vpack.c.b16 %v430, %v429
  %v494 = vpack.c.b16 %v432, %v431
  %v495 = vpack.c.b16 %v434, %v433
  %v496 = vpack.c.b16 %v436, %v435
  %v497 = vpack.c.b16 %v438, %v437
  %v498 = vpack.c.b16 %v440, %v439
  %v499 = vpack.c.b16 %v442, %v441
  %v500 = vpack.c.b16 %v444, %v443
  %v501 = vpack.c.b16 %v446, %v445
  %v502 = vpack.c.b16 %v448, %v447
  %v503 = vpack.c.b16 %v450, %v449
  %v504 = vpack.c.b16 %v452, %v451
  %v505 = vpack.c.b16 %v454, %v453
  %v506 = vpack.c.b16 %v456, %v455
  %v507 = vpack.c.b16 %v458, %v457
  %v508 = vpack.c.b16 %v460, %v459
  %557 = vmatprep.subr.bf16.mxu0 0
  %558 = vmatpush1.bf16.msra.mxu0 %v468
  %559 = vmatprep.subr.bf16.mxu0 0
  %560 = vmatpush1.bf16.msra.mxu0 %v467
  %561 = vmatprep.subr.bf16.mxu0 0
  %562 = vmatpush1.bf16.msra.mxu0 %v466
  %563 = vmatprep.subr.bf16.mxu0 0
  %564 = vmatpush1.bf16.msra.mxu0 %v465
  %565 = vmatprep.subr.bf16.mxu0 0
  %566 = vmatpush1.bf16.msra.mxu0 %v464
  %567 = vmatprep.subr.bf16.mxu0 0
  %568 = vmatpush1.bf16.msra.mxu0 %v463
  %569 = vmatprep.subr.bf16.mxu0 0
  %570 = vmatpush1.bf16.msra.mxu0 %v462
  %571 = vmatprep.subr.bf16.mxu0 0
  %572 = vmatpush1.bf16.msra.mxu0 %v461
  %573 = vmatprep.subr.bf16.mxu0 0
  %574 = vmatpush2.bf16.msra.mxu0 %v476
  %575 = vmatprep.subr.bf16.mxu0 0
  %576 = vmatpush2.bf16.msra.mxu0 %v475
  %577 = vmatprep.subr.bf16.mxu0 0
  %578 = vmatpush2.bf16.msra.mxu0 %v474
  %579 = vmatprep.subr.bf16.mxu0 0
  %580 = vmatpush2.bf16.msra.mxu0 %v473
  %581 = vmatprep.subr.bf16.mxu0 0
  %582 = vmatpush2.bf16.msra.mxu0 %v472
  %583 = vmatprep.subr.bf16.mxu0 0
  %584 = vmatpush2.bf16.msra.mxu0 %v471
  %585 = vmatprep.subr.bf16.mxu0 0
  %586 = vmatpush2.bf16.msra.mxu0 %v470
  %587 = vmatprep.subr.bf16.mxu0 0
  %588 = vmatpush2.bf16.msra.mxu0 %v469
  %589 = vmatprep.mubr.bf16.mxu0 %v119
  %590 = vmatmul.mubr.bf16.gmra.mxu0 %v118
  %v591 = vpop.f32.mrf.mxu0
  %v592 = vadd.f32 %v267, %v591
  %v593 = vpop.f32.mrf.mxu0
  %v594 = vpop.f32.mrf.mxu0
  %v595 = vadd.f32 %v267, %v594
  %v596 = vpop.f32.mrf.mxu0
  %597 = vmatprep.mubr.bf16.mxu0 %v125
  %598 = vmatmul.mubr.bf16.gmra.mxu0 %v124
  %v599 = vpop.f32.mrf.mxu0
  %v600 = vadd.f32 %v267, %v599
  %v601 = vpop.f32.mrf.mxu0
  %v602 = vpop.f32.mrf.mxu0
  %v603 = vadd.f32 %v267, %v602
  %v604 = vpop.f32.mrf.mxu0
  %605 = vmatprep.mubr.bf16.mxu0 %v131
  %606 = vmatmul.mubr.bf16.gmra.mxu0 %v130
  %v607 = vpop.f32.mrf.mxu0
  %v608 = vadd.f32 %v267, %v607
  %v609 = vpop.f32.mrf.mxu0
  %v610 = vpop.f32.mrf.mxu0
  %v611 = vadd.f32 %v267, %v610
  %v612 = vpop.f32.mrf.mxu0
  %613 = vmatprep.mubr.bf16.mxu0 %v137
  %614 = vmatmul.mubr.bf16.gmra.mxu0 %v136
  %v615 = vpop.f32.mrf.mxu0
  %v616 = vadd.f32 %v267, %v615
  %v617 = vpop.f32.mrf.mxu0
  %v618 = vpop.f32.mrf.mxu0
  %v619 = vadd.f32 %v267, %v618
  %v620 = vpop.f32.mrf.mxu0
  %621 = vmatprep.mubr.bf16.mxu0 %v143
  %622 = vmatmul.mubr.bf16.gmra.mxu0 %v142
  %v623 = vpop.f32.mrf.mxu0
  %v624 = vadd.f32 %v267, %v623
  %v625 = vpop.f32.mrf.mxu0
  %v626 = vpop.f32.mrf.mxu0
  %v627 = vadd.f32 %v267, %v626
  %v628 = vpop.f32.mrf.mxu0
  %629 = vmatprep.mubr.bf16.mxu0 %v149
  %630 = vmatmul.mubr.bf16.gmra.mxu0 %v148
  %v631 = vpop.f32.mrf.mxu0
  %v632 = vadd.f32 %v267, %v631
  %v633 = vpop.f32.mrf.mxu0
  %v634 = vpop.f32.mrf.mxu0
  %v635 = vadd.f32 %v267, %v634
  %v636 = vpop.f32.mrf.mxu0
  %637 = vmatprep.mubr.bf16.mxu0 %v155
  %638 = vmatmul.mubr.bf16.gmra.mxu0 %v154
  %v639 = vpop.f32.mrf.mxu0
  %v640 = vadd.f32 %v267, %v639
  %v641 = vpop.f32.mrf.mxu0
  %v642 = vpop.f32.mrf.mxu0
  %v643 = vadd.f32 %v267, %v642
  %v644 = vpop.f32.mrf.mxu0
  %645 = vmatprep.mubr.bf16.mxu0 %v161
  %646 = vmatmul.mubr.bf16.gmra.mxu0 %v160
  %v647 = vpop.f32.mrf.mxu0
  %v648 = vadd.f32 %v267, %v647
  %v649 = vpop.f32.mrf.mxu0
  %v650 = vpop.f32.mrf.mxu0
  %v651 = vadd.f32 %v267, %v650
  %v652 = vpop.f32.mrf.mxu0
  %653 = vdwg.mxu0
  %654 = vmatprep.subr.bf16.mxu0 0
  %655 = vmatpush1.bf16.msra.mxu0 %v484
  %656 = vmatprep.subr.bf16.mxu0 0
  %657 = vmatpush1.bf16.msra.mxu0 %v483
  %658 = vmatprep.subr.bf16.mxu0 0
  %659 = vmatpush1.bf16.msra.mxu0 %v482
  %660 = vmatprep.subr.bf16.mxu0 0
  %661 = vmatpush1.bf16.msra.mxu0 %v481
  %662 = vmatprep.subr.bf16.mxu0 0
  %663 = vmatpush1.bf16.msra.mxu0 %v480
  %664 = vmatprep.subr.bf16.mxu0 0
  %665 = vmatpush1.bf16.msra.mxu0 %v479
  %666 = vmatprep.subr.bf16.mxu0 0
  %667 = vmatpush1.bf16.msra.mxu0 %v478
  %668 = vmatprep.subr.bf16.mxu0 0
  %669 = vmatpush1.bf16.msra.mxu0 %v477
  %670 = vmatprep.subr.bf16.mxu0 0
  %671 = vmatpush2.bf16.msra.mxu0 %v492
  %672 = vmatprep.subr.bf16.mxu0 0
  %673 = vmatpush2.bf16.msra.mxu0 %v491
  %674 = vmatprep.subr.bf16.mxu0 0
  %675 = vmatpush2.bf16.msra.mxu0 %v490
  %676 = vmatprep.subr.bf16.mxu0 0
  %677 = vmatpush2.bf16.msra.mxu0 %v489
  %678 = vmatprep.subr.bf16.mxu0 0
  %679 = vmatpush2.bf16.msra.mxu0 %v488
  %680 = vmatprep.subr.bf16.mxu0 0
  %681 = vmatpush2.bf16.msra.mxu0 %v487
  %682 = vmatprep.subr.bf16.mxu0 0
  %683 = vmatpush2.bf16.msra.mxu0 %v486
  %684 = vmatprep.subr.bf16.mxu0 0
  %685 = vmatpush2.bf16.msra.mxu0 %v485
  %686 = vmatprep.mubr.bf16.mxu0 %v121
  %687 = vmatmul.mubr.bf16.gmra.mxu0 %v120
  %v688 = vpop.f32.mrf.mxu0
  %v689 = vadd.f32 %v592, %v688
  %v690 = vpop.f32.mrf.mxu0
  %v691 = vpop.f32.mrf.mxu0
  %v692 = vadd.f32 %v595, %v691
  %v693 = vpop.f32.mrf.mxu0
  %694 = vmatprep.mubr.bf16.mxu0 %v127
  %695 = vmatmul.mubr.bf16.gmra.mxu0 %v126
  %v696 = vpop.f32.mrf.mxu0
  %v697 = vadd.f32 %v600, %v696
  %v698 = vpop.f32.mrf.mxu0
  %v699 = vpop.f32.mrf.mxu0
  %v700 = vadd.f32 %v603, %v699
  %v701 = vpop.f32.mrf.mxu0
  %702 = vmatprep.mubr.bf16.mxu0 %v133
  %703 = vmatmul.mubr.bf16.gmra.mxu0 %v132
  %v704 = vpop.f32.mrf.mxu0
  %v705 = vadd.f32 %v608, %v704
  %v706 = vpop.f32.mrf.mxu0
  %v707 = vpop.f32.mrf.mxu0
  %v708 = vadd.f32 %v611, %v707
  %v709 = vpop.f32.mrf.mxu0
  %710 = vmatprep.mubr.bf16.mxu0 %v139
  %711 = vmatmul.mubr.bf16.gmra.mxu0 %v138
  %v712 = vpop.f32.mrf.mxu0
  %v713 = vadd.f32 %v616, %v712
  %v714 = vpop.f32.mrf.mxu0
  %v715 = vpop.f32.mrf.mxu0
  %v716 = vadd.f32 %v619, %v715
  %v717 = vpop.f32.mrf.mxu0
  %718 = vmatprep.mubr.bf16.mxu0 %v145
  %719 = vmatmul.mubr.bf16.gmra.mxu0 %v144
  %v720 = vpop.f32.mrf.mxu0
  %v721 = vadd.f32 %v624, %v720
  %v722 = vpop.f32.mrf.mxu0
  %v723 = vpop.f32.mrf.mxu0
  %v724 = vadd.f32 %v627, %v723
  %v725 = vpop.f32.mrf.mxu0
  %726 = vmatprep.mubr.bf16.mxu0 %v151
  %727 = vmatmul.mubr.bf16.gmra.mxu0 %v150
  %v728 = vpop.f32.mrf.mxu0
  %v729 = vadd.f32 %v632, %v728
  %v730 = vpop.f32.mrf.mxu0
  %v731 = vpop.f32.mrf.mxu0
  %v732 = vadd.f32 %v635, %v731
  %v733 = vpop.f32.mrf.mxu0
  %734 = vmatprep.mubr.bf16.mxu0 %v157
  %735 = vmatmul.mubr.bf16.gmra.mxu0 %v156
  %v736 = vpop.f32.mrf.mxu0
  %v737 = vadd.f32 %v640, %v736
  %v738 = vpop.f32.mrf.mxu0
  %v739 = vpop.f32.mrf.mxu0
  %v740 = vadd.f32 %v643, %v739
  %v741 = vpop.f32.mrf.mxu0
  %742 = vmatprep.mubr.bf16.mxu0 %v163
  %743 = vmatmul.mubr.bf16.gmra.mxu0 %v162
  %v744 = vpop.f32.mrf.mxu0
  %v745 = vadd.f32 %v648, %v744
  %v746 = vpop.f32.mrf.mxu0
  %v747 = vpop.f32.mrf.mxu0
  %v748 = vadd.f32 %v651, %v747
  %v749 = vpop.f32.mrf.mxu0
  %750 = vdwg.mxu0
  %751 = vmatprep.subr.bf16.mxu0 0
  %752 = vmatpush1.bf16.msra.mxu0 %v500
  %753 = vmatprep.subr.bf16.mxu0 0
  %754 = vmatpush1.bf16.msra.mxu0 %v499
  %755 = vmatprep.subr.bf16.mxu0 0
  %756 = vmatpush1.bf16.msra.mxu0 %v498
  %757 = vmatprep.subr.bf16.mxu0 0
  %758 = vmatpush1.bf16.msra.mxu0 %v497
  %759 = vmatprep.subr.bf16.mxu0 0
  %760 = vmatpush1.bf16.msra.mxu0 %v496
  %761 = vmatprep.subr.bf16.mxu0 0
  %762 = vmatpush1.bf16.msra.mxu0 %v495
  %763 = vmatprep.subr.bf16.mxu0 0
  %764 = vmatpush1.bf16.msra.mxu0 %v494
  %765 = vmatprep.subr.bf16.mxu0 0
  %766 = vmatpush1.bf16.msra.mxu0 %v493
  %767 = vmatprep.subr.bf16.mxu0 0
  %768 = vmatpush2.bf16.msra.mxu0 %v508
  %769 = vmatprep.subr.bf16.mxu0 0
  %770 = vmatpush2.bf16.msra.mxu0 %v507
  %771 = vmatprep.subr.bf16.mxu0 0
  %772 = vmatpush2.bf16.msra.mxu0 %v506
  %773 = vmatprep.subr.bf16.mxu0 0
  %774 = vmatpush2.bf16.msra.mxu0 %v505
  %775 = vmatprep.subr.bf16.mxu0 0
  %776 = vmatpush2.bf16.msra.mxu0 %v504
  %777 = vmatprep.subr.bf16.mxu0 0
  %778 = vmatpush2.bf16.msra.mxu0 %v503
  %779 = vmatprep.subr.bf16.mxu0 0
  %780 = vmatpush2.bf16.msra.mxu0 %v502
  %781 = vmatprep.subr.bf16.mxu0 0
  %782 = vmatpush2.bf16.msra.mxu0 %v501
  %783 = vmatprep.mubr.bf16.mxu0 %v123
  %784 = vmatmul.mubr.bf16.gmra.mxu0 %v122
  %v785 = vpop.f32.mrf.mxu0
  %v786 = vadd.f32 %v689, %v785
  %v787 = vpop.f32.mrf.mxu0
  %v788 = vpop.f32.mrf.mxu0
  %v789 = vadd.f32 %v692, %v788
  %v790 = vpop.f32.mrf.mxu0
  %791 = vmatprep.mubr.bf16.mxu0 %v129
  %792 = vmatmul.mubr.bf16.gmra.mxu0 %v128
  %v793 = vpop.f32.mrf.mxu0
  %v794 = vadd.f32 %v697, %v793
  %v795 = vpop.f32.mrf.mxu0
  %v796 = vpop.f32.mrf.mxu0
  %v797 = vadd.f32 %v700, %v796
  %v798 = vpop.f32.mrf.mxu0
  %799 = vmatprep.mubr.bf16.mxu0 %v135
  %800 = vmatmul.mubr.bf16.gmra.mxu0 %v134
  %v801 = vpop.f32.mrf.mxu0
  %v802 = vadd.f32 %v705, %v801
  %v803 = vpop.f32.mrf.mxu0
  %v804 = vpop.f32.mrf.mxu0
  %v805 = vadd.f32 %v708, %v804
  %v806 = vpop.f32.mrf.mxu0
  %807 = vmatprep.mubr.bf16.mxu0 %v141
  %808 = vmatmul.mubr.bf16.gmra.mxu0 %v140
  %v809 = vpop.f32.mrf.mxu0
  %v810 = vadd.f32 %v713, %v809
  %v811 = vpop.f32.mrf.mxu0
  %v812 = vpop.f32.mrf.mxu0
  %v813 = vadd.f32 %v716, %v812
  %v814 = vpop.f32.mrf.mxu0
  %815 = vmatprep.mubr.bf16.mxu0 %v147
  %816 = vmatmul.mubr.bf16.gmra.mxu0 %v146
  %v817 = vpop.f32.mrf.mxu0
  %v818 = vadd.f32 %v721, %v817
  %v819 = vpop.f32.mrf.mxu0
  %v820 = vpop.f32.mrf.mxu0
  %v821 = vadd.f32 %v724, %v820
  %v822 = vpop.f32.mrf.mxu0
  %823 = vmatprep.mubr.bf16.mxu0 %v153
  %824 = vmatmul.mubr.bf16.gmra.mxu0 %v152
  %v825 = vpop.f32.mrf.mxu0
  %v826 = vadd.f32 %v729, %v825
  %v827 = vpop.f32.mrf.mxu0
  %v828 = vpop.f32.mrf.mxu0
  %v829 = vadd.f32 %v732, %v828
  %v830 = vpop.f32.mrf.mxu0
  %831 = vmatprep.mubr.bf16.mxu0 %v159
  %832 = vmatmul.mubr.bf16.gmra.mxu0 %v158
  %v833 = vpop.f32.mrf.mxu0
  %v834 = vadd.f32 %v737, %v833
  %v835 = vpop.f32.mrf.mxu0
  %v836 = vpop.f32.mrf.mxu0
  %v837 = vadd.f32 %v740, %v836
  %v838 = vpop.f32.mrf.mxu0
  %839 = vmatprep.mubr.bf16.mxu0 %v165
  %840 = vmatmul.mubr.bf16.gmra.mxu0 %v164
  %v841 = vpop.f32.mrf.mxu0
  %v842 = vadd.f32 %v745, %v841
  %v843 = vpop.f32.mrf.mxu0
  %v844 = vpop.f32.mrf.mxu0
  %v845 = vadd.f32 %v748, %v844
  %v846 = vpop.f32.mrf.mxu0
  %847 = vdwg.mxu0
  %v848 = vmax.f32 %v786, 0.0
  %v849 = vmax.f32 %v789, 0.0
  %v850 = vmax.f32 %v794, 0.0
  %v851 = vmax.f32 %v797, 0.0
  %v852 = vmax.f32 %v802, 0.0
  %v853 = vmax.f32 %v805, 0.0
  %v854 = vmax.f32 %v810, 0.0
  %v855 = vmax.f32 %v813, 0.0
  %v856 = vmax.f32 %v818, 0.0
  %v857 = vmax.f32 %v821, 0.0
  %v858 = vmax.f32 %v826, 0.0
  %v859 = vmax.f32 %v829, 0.0
  %v860 = vmax.f32 %v834, 0.0
  %v861 = vmax.f32 %v837, 0.0
  %v862 = vmax.f32 %v842, 0.0
  %v863 = vmax.f32 %v845, 0.0
  %v864 = vld [vmem:[%s3] sm:$0x1]
  %v865 = vpack.c.bf16 %v849, %v848
  %v866 = vpack.c.bf16 %v851, %v850
  %v867 = vpack.c.bf16 %v853, %v852
  %v868 = vpack.c.bf16 %v855, %v854
  %v869 = vpack.c.bf16 %v857, %v856
  %v870 = vpack.c.bf16 %v859, %v858
  %v871 = vpack.c.bf16 %v861, %v860
  %v872 = vpack.c.bf16 %v863, %v862
  %s873 = sld [smem:[#allocation2]]
  %v874 = vstv %s873
  %875 = vmatprep.subr.bf16.mxu0 0
  %876 = vmatpush1.bf16.xpose.msra.mxu0 %v872
  %877 = vmatprep.subr.bf16.mxu0 0
  %878 = vmatpush1.bf16.xpose.msra.mxu0 %v871
  %879 = vmatprep.subr.bf16.mxu0 0
  %880 = vmatpush1.bf16.xpose.msra.mxu0 %v870
  %881 = vmatprep.subr.bf16.mxu0 0
  %882 = vmatpush1.bf16.xpose.msra.mxu0 %v869
  %883 = vmatprep.subr.bf16.mxu0 0
  %884 = vmatpush1.bf16.xpose.msra.mxu0 %v868
  %885 = vmatprep.subr.bf16.mxu0 0
  %886 = vmatpush1.bf16.xpose.msra.mxu0 %v867
  %887 = vmatprep.subr.bf16.mxu0 0
  %888 = vmatpush1.bf16.xpose.msra.mxu0 %v866
  %889 = vmatprep.subr.bf16.mxu0 0
  %890 = vmatpush1.bf16.xpose.msra.mxu0 %v865
  %891 = vmatprep.subr.bf16.mxu0 0
  %892 = vmatpush2.bf16.xpose.msra.mxu0 0
  %893 = vmatprep.subr.bf16.mxu0 0
  %894 = vmatpush2.bf16.xpose.msra.mxu0 0
  %895 = vmatprep.subr.bf16.mxu0 0
  %896 = vmatpush2.bf16.xpose.msra.mxu0 0
  %897 = vmatprep.subr.bf16.mxu0 0
  %898 = vmatpush2.bf16.xpose.msra.mxu0 0
  %899 = vmatprep.subr.bf16.mxu0 0
  %900 = vmatpush2.bf16.xpose.msra.mxu0 0
  %901 = vmatprep.subr.bf16.mxu0 0
  %902 = vmatpush2.bf16.xpose.msra.mxu0 0
  %903 = vmatprep.subr.bf16.mxu0 0
  %904 = vmatpush2.bf16.xpose.msra.mxu0 0
  %905 = vmatprep.subr.bf16.mxu0 0
  %906 = vmatpush2.bf16.xpose.msra.mxu0 0
  %907 = vmatprep.mubr.bf16.mxu0 0
  %908 = vmatmul.mubr.bf16.gmra.mxu0 %v864
  %v909 = vpop.f32.mrf.mxu0
  %v910 = vadd.f32 %v874, %v909
  %v911 = vpop.f32.mrf.mxu0
  %v912 = vpop.f32.mrf.mxu0
  %v913 = vpop.f32.mrf.mxu0
  %914 = vdwg.mxu0
  %v915 = vxor.u32 %v910, 2147483648
  %v916 = vmul.f32 %v915, 1.442695
  %v917 = vpow.pop %v916
  %v918 = vadd.f32 %v917, 1.0
  %v919 = vrcp.pop %v918
  %v920 = vmul.f32 1.0, %v919
  %921 = vst [vmem:[%s5] sm:$0x1] %v920
  // Predicated region
  $region22: #{difficulty_regressor.1} parent=0 // pred_check
    _
  $region23: #{difficulty_regressor.1} parent=0 // pred_check_branch
    %923 = sbr.rel (0) target = $region25
  $region24: #{difficulty_regressor.1} parent=0 // pred_region
    _
  $region25: #{difficulty_regressor.1} parent=0 // pred_fallthru
    _
  // Predicated region
  $region26: #{difficulty_regressor.1} parent=0 // pred_check
    _
  $region27: #{difficulty_regressor.1} parent=0 // pred_check_branch
    %925 = sbr.rel (0) target = $region29
  $region28: #{difficulty_regressor.1} parent=0 // pred_region
    _
  $region29: #{difficulty_regressor.1} parent=0 // pred_fallthru
    _

</llo_original>
